<compile_context>
chip_gen: v7x
topology: tpu7x:2x2x1
jax: 0.10.0
libtpu: 0.0.40
codegen_flags: <defaults>
</compile_context>

<pallas_src>
import math
from functools import partial

import numpy as np
from numpy.polynomial import legendre as npleg
from numpy.polynomial import polynomial as nppoly

import jax
import jax.numpy as jnp
from jax import lax
from jax.experimental import pallas as pl
from jax.experimental.pallas import tpu as pltpu


# ============================================================================
# Host-side (numpy) deterministic filter construction — Legendre base.
# Reproduces get_phi_psi / get_filter without sympy/scipy.
# ============================================================================

def phi_(phi_coeff, x, lb=0.0, ub=1.0):
    mask = np.logical_or(x < lb, x > ub).astype(np.float64)
    poly = np.poly1d(np.flip(phi_coeff))
    return poly(x) * (1 - mask)


def _shifted_legendre_coeffs(n, a, b):
    """Ascending power-series coefficients (in x) of P_n(a*x + b), length n+1."""
    c = np.zeros(n + 1, dtype=np.float64)
    c[n] = 1.0
    std = npleg.leg2poly(c)                      # ascending coeffs of P_n(t)
    P = nppoly.Polynomial(std)
    Q = P(nppoly.Polynomial([b, a]))             # compose t = a*x + b
    out = np.zeros(n + 1, dtype=np.float64)
    out[: len(Q.coef)] = Q.coef
    return out


def get_phi_psi_legendre(k):
    phi_coeff = np.zeros((k, k))
    phi_2x_coeff = np.zeros((k, k))
    for ki in range(k):
        phi_coeff[ki, : ki + 1] = np.sqrt(2 * ki + 1) * _shifted_legendre_coeffs(ki, 2.0, -1.0)
        phi_2x_coeff[ki, : ki + 1] = (
            np.sqrt(2) * np.sqrt(2 * ki + 1) * _shifted_legendre_coeffs(ki, 4.0, -1.0)
        )

    psi1_coeff = np.zeros((k, k))
    psi2_coeff = np.zeros((k, k))
    psi1, psi2 = [], []
    for ki in range(k):
        psi1_coeff[ki, :] = phi_2x_coeff[ki, :]
        psi2_coeff[ki, :] = phi_2x_coeff[ki, :]
        for i in range(k):
            a = phi_2x_coeff[ki, : ki + 1]
            b = phi_coeff[i, : i + 1]
            prod = np.convolve(a, b)
            prod[np.abs(prod) < 1e-8] = 0
            proj = (prod * (1 / (np.arange(len(prod)) + 1)) * 0.5 ** (1 + np.arange(len(prod)))).sum()
            psi1_coeff[ki, :] -= proj * phi_coeff[i, :]
            psi2_coeff[ki, :] -= proj * phi_coeff[i, :]
        for j in range(ki):
            a = phi_2x_coeff[ki, : ki + 1]
            b = psi1_coeff[j, :]
            prod = np.convolve(a, b)
            prod[np.abs(prod) < 1e-8] = 0
            proj = (prod * (1 / (np.arange(len(prod)) + 1)) * 0.5 ** (1 + np.arange(len(prod)))).sum()
            psi1_coeff[ki, :] -= proj * psi1_coeff[j, :]
            psi2_coeff[ki, :] -= proj * psi2_coeff[j, :]

        prod1 = np.convolve(psi1_coeff[ki, :], psi1_coeff[ki, :])
        prod1[np.abs(prod1) < 1e-8] = 0
        norm1 = (prod1 * (1 / (np.arange(len(prod1)) + 1)) * 0.5 ** (1 + np.arange(len(prod1)))).sum()
        prod2 = np.convolve(psi2_coeff[ki, :], psi2_coeff[ki, :])
        prod2[np.abs(prod2) < 1e-8] = 0
        norm2 = (prod2 * (1 / (np.arange(len(prod2)) + 1)) * (1 - 0.5 ** (1 + np.arange(len(prod2))))).sum()
        norm = np.sqrt(norm1 + norm2)
        psi1_coeff[ki, :] /= norm
        psi2_coeff[ki, :] /= norm
        psi1_coeff[np.abs(psi1_coeff) < 1e-8] = 0
        psi2_coeff[np.abs(psi2_coeff) < 1e-8] = 0
        psi1.append(partial(phi_, psi1_coeff[ki, :].copy(), lb=0, ub=0.5))
        psi2.append(partial(phi_, psi2_coeff[ki, :].copy(), lb=0.5, ub=1))

    phi = [np.poly1d(np.flip(phi_coeff[i, :])) for i in range(k)]
    return phi, psi1, psi2


def get_filter_legendre(k):
    def psi_eval(psi1, psi2, i, inp):
        mask = (inp <= 0.5).astype(np.float64)
        return psi1[i](inp) * mask + psi2[i](inp) * (1 - mask)

    phi, psi1, psi2 = get_phi_psi_legendre(k)
    H0 = np.zeros((k, k)); H1 = np.zeros((k, k))
    G0 = np.zeros((k, k)); G1 = np.zeros((k, k))

    # Gauss-Legendre nodes/weights on [0, 1]  (== roots of P_k(2x-1), wm = w/2)
    t, w = npleg.leggauss(k)
    x_m = (t + 1.0) / 2.0
    wm = w / 2.0

    for ki in range(k):
        for kpi in range(k):
            H0[ki, kpi] = 1 / np.sqrt(2) * (wm * phi[ki](x_m / 2) * phi[kpi](x_m)).sum()
            G0[ki, kpi] = 1 / np.sqrt(2) * (wm * psi_eval(psi1, psi2, ki, x_m / 2) * phi[kpi](x_m)).sum()
            H1[ki, kpi] = 1 / np.sqrt(2) * (wm * phi[ki]((x_m + 1) / 2) * phi[kpi](x_m)).sum()
            G1[ki, kpi] = 1 / np.sqrt(2) * (wm * psi_eval(psi1, psi2, ki, (x_m + 1) / 2) * phi[kpi](x_m)).sum()
    PHI0 = np.eye(k)
    PHI1 = np.eye(k)
    for M in (H0, H1, G0, G1):
        M[np.abs(M) < 1e-8] = 0
    return H0, H1, G0, G1, PHI0, PHI1


# ============================================================================
# Pallas kernels
# ============================================================================

_DEF_TILE_M = 4096               # rows per block for the row-wise matmul kernels
_DEF_TILE_B = 8                  # batch rows per block in the frequency-mix kernel
_VMEM_LIMIT = 32 * 1024 * 1024   # explicit, safe on v5e/v6e (128 MiB) and v7x (64 MiB)


def _cparams(ndim):
    return pltpu.CompilerParams(
        dimension_semantics=("parallel",) * ndim,
        vmem_limit_bytes=_VMEM_LIMIT,
    )


def _tile_rows(M, tile_m):
    # tile_m is a multiple of 8; if M is smaller, use the full extent (always legal).
    return min(tile_m, M)


def _round_up(v, m):
    return ((v + m - 1) // m) * m


# ---- wavelet analysis: one dual-output matmul over packed block-diagonal filters ----

def _analysis_kernel(x_ref, wd_ref, ws_ref, d_ref, s_ref):
    x = x_ref[...]
    d_ref[...] = jnp.dot(x, wd_ref[...], preferred_element_type=jnp.float32)
    s_ref[...] = jnp.dot(x, ws_ref[...], preferred_element_type=jnp.float32)


def analysis_matmul(x2d, wd, ws, tile_m=_DEF_TILE_M):
    """x2d: [M, 2ck] (pos,channel,degree view); wd/ws: [2ck, ck] -> (d, s) each [M, ck]."""
    M, Kin = x2d.shape
    Nout = wd.shape[1]
    tm = _tile_rows(M, tile_m)
    grid = (pl.cdiv(M, tm),)
    x_spec = pl.BlockSpec((tm, Kin), lambda i: (i, 0))
    o_spec = pl.BlockSpec((tm, Nout), lambda i: (i, 0))
    wd_spec = pl.BlockSpec(wd.shape, lambda i: (0, 0))
    ws_spec = pl.BlockSpec(ws.shape, lambda i: (0, 0))
    out_sd = jax.ShapeDtypeStruct((M, Nout), jnp.float32)
    return pl.pallas_call(
        _analysis_kernel,
        grid=grid,
        in_specs=[x_spec, wd_spec, ws_spec],
        out_specs=(o_spec, o_spec),
        out_shape=(out_sd, out_sd),
        compiler_params=_cparams(1),
    )(x2d, wd, ws)


# ---- synthesis (even/odd) with the "x + Us" add fused in ----

def _synthesis_kernel(x_ref, us_ref, ud_ref, wx_ref, wud_ref, o_ref):
    xs = x_ref[...] + us_ref[...]
    o_ref[...] = (
        jnp.dot(xs, wx_ref[...], preferred_element_type=jnp.float32)
        + jnp.dot(ud_ref[...], wud_ref[...], preferred_element_type=jnp.float32)
    )


def synthesis_matmul(x2d, us2d, ud2d, wx, wud, tile_m=_DEF_TILE_M):
    """x2d, us2d, ud2d: [M, ck]; wx, wud: [ck, 2ck] -> [M, 2ck] (even|odd interleave view)."""
    M, ck = x2d.shape
    Nout = wx.shape[1]
    tm = _tile_rows(M, tile_m)
    grid = (pl.cdiv(M, tm),)
    in_spec = pl.BlockSpec((tm, ck), lambda i: (i, 0))
    o_spec = pl.BlockSpec((tm, Nout), lambda i: (i, 0))
    wx_spec = pl.BlockSpec(wx.shape, lambda i: (0, 0))
    wud_spec = pl.BlockSpec(wud.shape, lambda i: (0, 0))
    return pl.pallas_call(
        _synthesis_kernel,
        grid=grid,
        in_specs=[in_spec, in_spec, in_spec, wx_spec, wud_spec],
        out_specs=o_spec,
        out_shape=jax.ShapeDtypeStruct((M, Nout), jnp.float32),
        compiler_params=_cparams(1),
    )(x2d, us2d, ud2d, wx, wud)


# ---- T0 linear on the (packed) channel*degree lane ----

def _linear_kernel(x_ref, w_ref, b_ref, o_ref):
    o_ref[...] = jnp.dot(x_ref[...], w_ref[...], preferred_element_type=jnp.float32) + b_ref[...]


def linear_apply(x2d, w_bd, b_bd, tile_m=_DEF_TILE_M):
    """x2d: [M, ck]; w_bd: [ck, ck]; b_bd: [1, ck]  ->  x2d @ w_bd + b."""
    M, ck = x2d.shape
    Nout = w_bd.shape[1]
    tm = _tile_rows(M, tile_m)
    grid = (pl.cdiv(M, tm),)
    x_spec = pl.BlockSpec((tm, ck), lambda i: (i, 0))
    o_spec = pl.BlockSpec((tm, Nout), lambda i: (i, 0))
    w_spec = pl.BlockSpec(w_bd.shape, lambda i: (0, 0))
    b_spec = pl.BlockSpec(b_bd.shape, lambda i: (0, 0))
    return pl.pallas_call(
        _linear_kernel,
        grid=grid,
        in_specs=[x_spec, w_spec, b_spec],
        out_specs=o_spec,
        out_shape=jax.ShapeDtypeStruct((M, Nout), jnp.float32),
        compiler_params=_cparams(1),
    )(x2d, w_bd, b_bd)


# ---- fused frequency-mode mixing for A(d)+B(x) and C(d), modes on the lane axis ----

def _freqmix_kernel(dr_ref, di_ref, xr_ref, xi_ref,
                    awr_ref, awi_ref, bwr_ref, bwi_ref, cwr_ref, cwi_ref,
                    udr_ref, udi_ref, usr_ref, usi_ref, *, ck):
    dr = dr_ref[...]; di = di_ref[...]
    xr = xr_ref[...]; xi = xi_ref[...]
    awr = awr_ref[...]; awi = awi_ref[...]
    bwr = bwr_ref[...]; bwi = bwi_ref[...]
    cwr = cwr_ref[...]; cwi = cwi_ref[...]
    Bq, _, L = dr.shape
    udr = jnp.zeros((Bq, ck, L), jnp.float32)
    udi = jnp.zeros((Bq, ck, L), jnp.float32)
    usr = jnp.zeros((Bq, ck, L), jnp.float32)
    usi = jnp.zeros((Bq, ck, L), jnp.float32)
    # ck is tiny and static -> fully unrolled VPU multiply-accumulate over the contraction
    # index; the mode axis stays on the 128-wide lane dimension (lane-dense loads/stores).
    for i in range(ck):
        dri = dr[:, i:i + 1, :]
        dii = di[:, i:i + 1, :]
        xri = xr[:, i:i + 1, :]
        xii = xi[:, i:i + 1, :]
        awri = awr[i][None]; awii = awi[i][None]
        bwri = bwr[i][None]; bwii = bwi[i][None]
        cwri = cwr[i][None]; cwii = cwi[i][None]
        udr = udr + (dri * awri - dii * awii) + (xri * bwri - xii * bwii)
        udi = udi + (dri * awii + dii * awri) + (xri * bwii + xii * bwri)
        usr = usr + (dri * cwri - dii * cwii)
        usi = usi + (dri * cwii + dii * cwri)
    udr_ref[...] = udr
    udi_ref[...] = udi
    usr_ref[...] = usr
    usi_ref[...] = usi


def freq_mode_mix(dr, di, xr, xi, weights, ck, tile_b=_DEF_TILE_B):
    """dr/di/xr/xi: [B, ck, Lp] (Lp % 128 == 0); weights: 6 x [ck, ck, Lp].
    Returns (ud_r, ud_i, us_r, us_i) = (A*d+B*x, C*d) real/imag parts, [B, ck, Lp]."""
    B, _, Lp = dr.shape
    assert Lp % 128 == 0
    tb = min(tile_b, B)
    grid = (pl.cdiv(B, tb), Lp // 128)
    x_spec = pl.BlockSpec((tb, ck, 128), lambda b, m: (b, 0, m))
    w_spec = pl.BlockSpec((ck, ck, 128), lambda b, m: (0, 0, m))
    out_sd = jax.ShapeDtypeStruct((B, ck, Lp), jnp.float32)
    return pl.pallas_call(
        partial(_freqmix_kernel, ck=ck),
        grid=grid,
        in_specs=[x_spec] * 4 + [w_spec] * 6,
        out_specs=(x_spec,) * 4,
        out_shape=(out_sd,) * 4,
        compiler_params=_cparams(2),
    )(dr, di, xr, xi, *weights)


# ============================================================================
# Module forward (FFT glue in JAX, everything else in Pallas)
# ============================================================================

def wavelet_transform(x, params, c, k, tile_m):
    """x: [B, N, c, k] -> (d, s), each [B, N//2, c, k]."""
    B, N, _, _ = x.shape
    Nh = N // 2
    ck = c * k
    x2 = x.reshape(B * Nh, 2 * ck)     # free view: lane layout = (even/odd, channel, degree)
    d2, s2 = analysis_matmul(x2, params["Wd_packed"], params["Ws_packed"], tile_m)
    return d2.reshape(B, Nh, c, k), s2.reshape(B, Nh, c, k)


def even_odd_fused(x, us, ud, params, c, k, tile_m):
    """(x + us | ud) synthesis + even/odd interleave: [B, Nh, c, k] x3 -> [B, 2Nh, c, k]."""
    B, Nh, _, _ = x.shape
    ck = c * k
    M = B * Nh
    out2 = synthesis_matmul(
        x.reshape(M, ck), us.reshape(M, ck), ud.reshape(M, ck),
        params["Wx_syn"], params["Wud_syn"], tile_m)
    return out2.reshape(B, 2 * Nh, c, k)   # free view: (even, odd) lanes interleave positions


def prepare_freq_weights(params, alpha, Lp_max):
    """One-time per forward: keep modes < alpha, zero elsewhere, pad/truncate to Lp_max lanes.
    Combined with zero-padded spectra beyond Lf, this exactly reproduces
    out_ft[:, :, :l] = x_hat[:, :, :l] @ W[:, :, :l]; out_ft[:, :, l:] = 0 for every level."""
    l = min(alpha, Lp_max)
    def prep(w):
        return jnp.pad(w[:, :, :l], ((0, 0), (0, 0), (0, Lp_max - l)))
    return [prep(params[n]) for n in ("A_w1", "A_w2", "B_w1", "B_w2", "C_w1", "C_w2")]


def level_freq_mix(d, x, freq_weights, c, k):
    """Per-level fused SparseKernelFT1d: returns (Ud_level, Us_level), each [B, Nh, c, k]."""
    B, Nh, _, _ = d.shape
    ck = c * k
    dv = jnp.transpose(d.reshape(B, Nh, ck), (0, 2, 1))       # [B, ck, Nh]
    xv = jnp.transpose(x.reshape(B, Nh, ck), (0, 2, 1))
    df = jnp.fft.rfft(dv, axis=-1)                            # [B, ck, Lf]
    xf = jnp.fft.rfft(xv, axis=-1)
    Lf = Nh // 2 + 1
    Lp = _round_up(Lf, 128)
    pad_x = Lp - Lf

    def prep_x(z):
        return jnp.pad(z, ((0, 0), (0, 0), (0, pad_x)))

    dr = prep_x(jnp.real(df)); di = prep_x(jnp.imag(df))
    xr = prep_x(jnp.real(xf)); xi = prep_x(jnp.imag(xf))

    # Pre-padded full-forward weights; per level just take the first Lp lane-modes.
    weights = [w[:, :, :Lp] for w in freq_weights]
    udr, udi, usr, usi = freq_mode_mix(dr, di, xr, xi, weights, ck)

    ud_hat = lax.complex(udr[:, :, :Lf], udi[:, :, :Lf])
    us_hat = lax.complex(usr[:, :, :Lf], usi[:, :, :Lf])
    ud = jnp.fft.irfft(ud_hat, n=Nh, axis=-1)                 # [B, ck, Nh] float32
    us = jnp.fft.irfft(us_hat, n=Nh, axis=-1)
    ud = jnp.transpose(ud, (0, 2, 1)).reshape(B, Nh, c, k).astype(jnp.float32)
    us = jnp.transpose(us, (0, 2, 1)).reshape(B, Nh, c, k).astype(jnp.float32)
    return ud, us


def mwt_cz1d_forward(x, params, k, c, alpha, L, tile_m=_DEF_TILE_M):
    B, N, _, _ = x.shape
    ck = c * k
    ns = int(math.floor(np.log2(N)))
    nl = 2 ** int(math.ceil(np.log2(N)))
    if nl > N:
        x = jnp.concatenate([x, x[:, : nl - N, :, :]], axis=1)

    n_levels = ns - L
    freq_weights = None
    if n_levels > 0:
        Lf_max = (nl // 2) // 2 + 1                 # level-0 rfft length (largest of all levels)
        Lp_max = _round_up(Lf_max, 128)
        freq_weights = prepare_freq_weights(params, alpha, Lp_max)

    Ud, Us = [], []
    for _ in range(n_levels):
        d, x = wavelet_transform(x, params, c, k, tile_m)
        ud_l, us_l = level_freq_mix(d, x, freq_weights, c, k)   # A(d)+B(x) and C(d), fused
        Ud.append(ud_l)
        Us.append(us_l)

    Bc, Nc, _, _ = x.shape
    xt = linear_apply(x.reshape(Bc * Nc, ck), params["T0_w_bd"], params["T0_b_bd"], tile_m)
    x = xt.reshape(Bc, Nc, c, k)

    for i in reversed(range(n_levels)):
        x = even_odd_fused(x, Us[i], Ud[i], params, c, k, tile_m)

    return x[:, :N, :, :]


# ============================================================================
# Parameter construction (block-diagonal channel packing done host-side)
# ============================================================================

def init_params(key, k, c, alpha):
    H0, H1, G0, G1, PHI0, PHI1 = get_filter_legendre(k)
    H0r = H0 @ PHI0
    G0r = G0 @ PHI0
    H1r = H1 @ PHI1
    G1r = G1 @ PHI1
    for M in (H0r, H1r, G0r, G1r):
        M[np.abs(M) < 1e-8] = 0

    ec_s = np.concatenate((H0.T, H1.T), axis=0)    # [2k, k]
    ec_d = np.concatenate((G0.T, G1.T), axis=0)    # [2k, k]
    rc_e = np.concatenate((H0r, G0r), axis=0)      # [2k, k]
    rc_o = np.concatenate((H1r, G1r), axis=0)      # [2k, k]

    eye_c = np.eye(c)

    def bd(m):  # block-diagonal: c copies of m on the diagonal
        return np.kron(eye_c, m)

    # Analysis weights for the [B*Nh, 2ck] view with lane layout (even/odd, channel, degree):
    #   Wd[pos*ck + j*k + a, j*k + b] = ec_d[pos*k + a, b]
    Wd_packed = np.concatenate([bd(ec_d[:k, :]), bd(ec_d[k:, :])], axis=0)   # [2ck, ck]
    Ws_packed = np.concatenate([bd(ec_s[:k, :]), bd(ec_s[k:, :])], axis=0)   # [2ck, ck]
    # Synthesis weights; output lane layout (even/odd, channel, degree) on 2ck lanes:
    Wx_syn = np.concatenate([bd(rc_e[:k, :]), bd(rc_o[:k, :])], axis=1)      # [ck, 2ck]
    Wud_syn = np.concatenate([bd(rc_e[k:, :]), bd(rc_o[k:, :])], axis=1)     # [ck, 2ck]

    ck = c * k
    scale = 1.0 / (ck * ck)
    keys = jax.random.split(key, 8)
    bound = 1.0 / math.sqrt(k)
    W_t0 = jax.random.uniform(keys[6], (k, k), jnp.float32, -bound, bound)   # nn.Linear weight
    b_t0 = jax.random.uniform(keys[7], (k,), jnp.float32, -bound, bound)

    params = {
        # packed (block-diagonal) kernel weights
        "Wd_packed": jnp.asarray(Wd_packed, jnp.float32),
        "Ws_packed": jnp.asarray(Ws_packed, jnp.float32),
        "Wx_syn": jnp.asarray(Wx_syn, jnp.float32),
        "Wud_syn": jnp.asarray(Wud_syn, jnp.float32),
        "T0_w_bd": jnp.kron(jnp.eye(c, dtype=jnp.float32), W_t0.T),          # [ck, ck]
        "T0_b_bd": jnp.tile(b_t0, (c,))[None, :],                            # [1, ck]
        # SparseKernelFT1d weights (A, B, C), real/imag
        "A_w1": scale * jax.random.normal(keys[0], (ck, ck, alpha), jnp.float32),
        "A_w2": scale * jax.random.normal(keys[1], (ck, ck, alpha), jnp.float32),
        "B_w1": scale * jax.random.normal(keys[2], (ck, ck, alpha), jnp.float32),
        "B_w2": scale * jax.random.normal(keys[3], (ck, ck, alpha), jnp.float32),
        "C_w1": scale * jax.random.normal(keys[4], (ck, ck, alpha), jnp.float32),
        "C_w2": scale * jax.random.normal(keys[5], (ck, ck, alpha), jnp.float32),
        # raw (unpacked) buffers, kept only for the pure-JAX validation path
        "ec_s": jnp.asarray(ec_s, jnp.float32),
        "ec_d": jnp.asarray(ec_d, jnp.float32),
        "rc_e": jnp.asarray(rc_e, jnp.float32),
        "rc_o": jnp.asarray(rc_o, jnp.float32),
        "T0_w": W_t0,
        "T0_b": b_t0,
    }
    return params


# ============================================================================
# Pure-JAX reference (mirrors the PyTorch module), used only for validation.
# ============================================================================

def _ref_sparse_ft(x, w1, w2, alpha):
    B, N, c, k = x.shape
    ck = c * k
    xv = jnp.transpose(x.reshape(B, N, ck), (0, 2, 1))
    xf = jnp.fft.rfft(xv, axis=-1)
    Lf = xf.shape[-1]
    l = min(alpha, Lf)
    w = w1[:, :, :l] + 1j * w2[:, :, :l]
    out = jnp.einsum('bix,iox->box', xf[:, :, :l], w)
    out_full = jnp.zeros((B, ck, Lf), jnp.complex64).at[:, :, :l].set(out)
    y = jnp.fft.irfft(out_full, n=N, axis=-1)
    return jnp.transpose(y, (0, 2, 1)).reshape(B, N, c, k)


def _reference_forward(x, params, k, c, alpha, L):
    ec_d = params["ec_d"]; ec_s = params["ec_s"]
    rc_e = params["rc_e"]; rc_o = params["rc_o"]
    B, N, _, _ = x.shape
    ns = int(math.floor(np.log2(N)))
    nl = 2 ** int(math.ceil(np.log2(N)))
    if nl > N:
        x = jnp.concatenate([x, x[:, : nl - N]], axis=1)
    Ud, Us = [], []
    for _ in range(ns - L):
        xa = jnp.concatenate([x[:, ::2], x[:, 1::2]], axis=-1)
        d = xa @ ec_d
        x = xa @ ec_s
        Ud.append(_ref_sparse_ft(d, params["A_w1"], params["A_w2"], alpha)
                  + _ref_sparse_ft(x, params["B_w1"], params["B_w2"], alpha))
        Us.append(_ref_sparse_ft(d, params["C_w1"], params["C_w2"], alpha))
    x = x @ params["T0_w"].T + params["T0_b"]
    for i in reversed(range(ns - L)):
        x = x + Us[i]
        xcat = jnp.concatenate([x, Ud[i]], axis=-1)
        x_e = xcat @ rc_e
        x_o = xcat @ rc_o
        Bc, Nc, cc, kc = x_e.shape
        x = jnp.stack([x_e, x_o], axis=2).reshape(Bc, 2 * Nc, cc, kc)
    return x[:, :N]


if __name__ == "__main__":
    # Small, module-consistent shapes: x is [B, N, c, k]
    B, N, c, k = 2, 16, 4, 3
    alpha, L = 16, 0

    key = jax.random.PRNGKey(0)
    key_p, key_x = jax.random.split(key)
    params = init_params(key_p, k, c, alpha)
    x = jax.random.normal(key_x, (B, N, c, k), jnp.float32)

    y = mwt_cz1d_forward(x, params, k=k, c=c, alpha=alpha, L=L)
    y = jax.block_until_ready(y)

    assert y.shape == (B, N, c, k), y.shape
    assert y.dtype == jnp.float32
    assert bool(jnp.all(jnp.isfinite(y)))

    # Validate against a pure-JAX reference of the PyTorch module.
    with jax.default_matmul_precision("float32"):
        y_ref = jax.block_until_ready(_reference_forward(x, params, k, c, alpha, L))
    np.testing.assert_allclose(np.asarray(y), np.asarray(y_ref), rtol=3e-2, atol=3e-2)

    print("KERNEL_OK")
</pallas_src>

<mosaic_0001>
module attributes {stable_mosaic.version = 11 : i64} {
  func.func @_analysis_kernel(%arg0: i32, %arg1: memref<16x24xf32, #tpu.memory_space<vmem>>, %arg2: memref<24x12xf32, #tpu.memory_space<vmem>>, %arg3: memref<24x12xf32, #tpu.memory_space<vmem>>, %arg4: memref<16x12xf32, #tpu.memory_space<vmem>>, %arg5: memref<16x12xf32, #tpu.memory_space<vmem>>) attributes {dimension_semantics = [#tpu.dimension_semantics<parallel>], iteration_bounds = array<i64: 1>, scalar_prefetch = 0 : i64, scratch_operands = 0 : i64, tpu.core_type = #tpu.core_type<tc>, window_params = [{transform_indices = @transform_0, window_bounds = array<i64: 16, 24>}, {pipeline_mode = #tpu.pipeline_mode<synchronous>, transform_indices = @transform_1, window_bounds = array<i64: 24, 12>}, {pipeline_mode = #tpu.pipeline_mode<synchronous>, transform_indices = @transform_2, window_bounds = array<i64: 24, 12>}, {transform_indices = @transform_3, window_bounds = array<i64: 16, 12>}, {transform_indices = @transform_4, window_bounds = array<i64: 16, 12>}]} {
    %c0 = arith.constant 0 : index
    %c0_0 = arith.constant 0 : index
    %0 = vector.load %arg1[%c0, %c0_0] : memref<16x24xf32, #tpu.memory_space<vmem>>, vector<16x24xf32>
    %c0_1 = arith.constant 0 : index
    %c0_2 = arith.constant 0 : index
    %1 = vector.load %arg2[%c0_1, %c0_2] : memref<24x12xf32, #tpu.memory_space<vmem>>, vector<24x12xf32>
    %cst = arith.constant dense<0.000000e+00> : vector<16x12xf32>
    %2 = tpu.matmul %0, %1, %cst {dimension_numbers = #tpu.dot_dimension_numbers<[1], [0], [0], [1], [0, 0, 1, 1], [], []>} : vector<16x24xf32>, vector<24x12xf32>, vector<16x12xf32> -> vector<16x12xf32>
    %c0_3 = arith.constant 0 : index
    %c0_4 = arith.constant 0 : index
    %3 = vector.load %arg4[%c0_3, %c0_4] : memref<16x12xf32, #tpu.memory_space<vmem>>, vector<16x12xf32>
    tpu.vector_store %arg4[%c0_3, %c0_4], %2 {strides = array<i32>} : memref<16x12xf32, #tpu.memory_space<vmem>>, vector<16x12xf32>,
    %c0_5 = arith.constant 0 : index
    %c0_6 = arith.constant 0 : index
    %4 = vector.load %arg3[%c0_5, %c0_6] : memref<24x12xf32, #tpu.memory_space<vmem>>, vector<24x12xf32>
    %cst_7 = arith.constant dense<0.000000e+00> : vector<16x12xf32>
    %5 = tpu.matmul %0, %4, %cst_7 {dimension_numbers = #tpu.dot_dimension_numbers<[1], [0], [0], [1], [0, 0, 1, 1], [], []>} : vector<16x24xf32>, vector<24x12xf32>, vector<16x12xf32> -> vector<16x12xf32>
    %c0_8 = arith.constant 0 : index
    %c0_9 = arith.constant 0 : index
    %6 = vector.load %arg5[%c0_8, %c0_9] : memref<16x12xf32, #tpu.memory_space<vmem>>, vector<16x12xf32>
    tpu.vector_store %arg5[%c0_8, %c0_9], %5 {strides = array<i32>} : memref<16x12xf32, #tpu.memory_space<vmem>>, vector<16x12xf32>,
    return
  }
  func.func @transform_0(%arg0: i32) -> (i32, i32) {
    %c0_i32 = arith.constant 0 : i32
    %c0_i32_0 = arith.constant 0 : i32
    return %arg0, %c0_i32 : i32, i32
  }
  func.func @transform_1(%arg0: i32) -> (i32, i32) {
    %c0_i32 = arith.constant 0 : i32
    %c0_i32_0 = arith.constant 0 : i32
    %c0_i32_1 = arith.constant 0 : i32
    return %c0_i32, %c0_i32_0 : i32, i32
  }
  func.func @transform_2(%arg0: i32) -> (i32, i32) {
    %c0_i32 = arith.constant 0 : i32
    %c0_i32_0 = arith.constant 0 : i32
    %c0_i32_1 = arith.constant 0 : i32
    return %c0_i32, %c0_i32_0 : i32, i32
  }
  func.func @transform_3(%arg0: i32) -> (i32, i32) {
    %c0_i32 = arith.constant 0 : i32
    %c0_i32_0 = arith.constant 0 : i32
    return %arg0, %c0_i32 : i32, i32
  }
  func.func @transform_4(%arg0: i32) -> (i32, i32) {
    %c0_i32 = arith.constant 0 : i32
    %c0_i32_0 = arith.constant 0 : i32
    return %arg0, %c0_i32 : i32, i32
  }
}

</mosaic_0001>

<llo_original>
// kernel: tpu_custom_call.1
$region0: #{tpu_custom_call.1}
  #allocation0 [shape = 'u32[]', space=smem, size = 0x4, offset = 0x4, fixed_abs, tag = 'smem constant byte address 0x4 - core index']
  #allocation1 [shape = 'u32[144,128]{1,0:T(1,128)}', space=vmem, size = 0x12000, scoped, tag = 'internal scratch']
  %s0 = inlined_call_operand.vmem [shape: f32[16,24], index: 0, kind: input, shape index: {}]
  %s1 = inlined_call_operand.vmem [shape: f32[24,12], index: 1, kind: input, shape index: {}]
  %s2 = inlined_call_operand.vmem [shape: f32[24,12], index: 2, kind: input, shape index: {}]
  %s3 = inlined_call_operand.hbm [shape: f32[16,12], index: 3, kind: output, shape index: {0}]
  %s4 = inlined_call_operand.hbm [shape: f32[16,12], index: 4, kind: output, shape index: {1}]
  %5 = xla_tuple %s3, %s4
  %s6 = sld [smem:[#allocation0]]
  $region30: #{tpu_custom_call.1} parent=0
    _
  %s8 = ssub.s32 1, %s6
  %s9 = scalar_select 0, %s8, %s6
  $region1: #{tpu_custom_call.1} parent=0
    #allocation2 [shape = 'u8[8192]{0}', space=vmem, size = 0x2000, scoped, tag = 'output window, operand 0, single buffered']
    #allocation3 [shape = 's32[1]{0}', space=sflag, size = 0x4, scoped, tag = 'scoped memory for tpu_custom_call.1']
    #allocation4 [shape = 'u8[8192]{0}', space=vmem, size = 0x2000, scoped, tag = 'output window, operand 1, single buffered']
    #allocation5 [shape = 's32[1]{0}', space=sflag, size = 0x4, scoped, tag = 'scoped memory for tpu_custom_call.1']
    %10 = vsyncpa [#allocation3], 0
    %11 = vsyncpa [#allocation5], 0
    // Predicated region
    $region2: #{tpu_custom_call.1} parent=1 // pred_check
      _
    $region3: #{tpu_custom_call.1} parent=1 // pred_check_branch
      %13 = sbr.rel (0) target = $region5
    $region4: #{tpu_custom_call.1} parent=1 // pred_region
      _
    $region5: #{tpu_custom_call.1} parent=1 // pred_fallthru
      _
    // Predicated region
    $region6: #{tpu_custom_call.1} parent=1 // pred_check
      _
    $region7: #{tpu_custom_call.1} parent=1 // pred_check_branch
      %15 = sbr.rel (0) target = $region9
    $region8: #{tpu_custom_call.1} parent=1 // pred_region
      _
    $region9: #{tpu_custom_call.1} parent=1 // pred_fallthru
      _
    // Predicated region
    $region10: #{tpu_custom_call.1} parent=1 // pred_check
      _
    $region11: #{tpu_custom_call.1} parent=1 // pred_check_branch
      %17 = sbr.rel (0) target = $region13
    $region12: #{tpu_custom_call.1} parent=1 // pred_region
      _
    $region13: #{tpu_custom_call.1} parent=1 // pred_fallthru
      _
    %v18 = vld [vmem:[%s0] sm:$0xff]
    %v19 = vld [vmem:[%s0 + $0x8] sm:$0xff]
    %v20 = vld [vmem:[%s1] sm:$0xff]
    %v21 = vld [vmem:[%s1 + $0x8] sm:$0xff]
    %v22 = vld [vmem:[%s1 + $0x10] sm:$0xff]
    %vm23 = vcmask 195584
    %v25 = vsel %vm23, %v18, 0
    %v28 = vsel %vm23, %v19, 0
    %30 = vmatprep.subr.mxu0 0.0
    %31 = vmatpush1.msra.mxu0 %v20
    %32 = vmatprep.subr.mxu0 0.0
    %33 = vmatpush1.msra.mxu0 %v21
    %34 = vmatprep.subr.mxu0 0.0
    %35 = vmatpush1.msra.mxu0 %v22
    %36 = vmatprep.subr.mxu0 0.0
    %37 = vmatpush1.msra.mxu0 0.0
    %38 = vmatprep.subr.mxu0 0.0
    %39 = vmatpush1.msra.mxu0 0.0
    %40 = vmatprep.subr.mxu0 0.0
    %41 = vmatpush1.msra.mxu0 0.0
    %42 = vmatprep.subr.mxu0 0.0
    %43 = vmatpush1.msra.mxu0 0.0
    %44 = vmatprep.subr.mxu0 0.0
    %45 = vmatpush1.msra.mxu0 0.0
    %46 = vmatprep.subr.mxu0 0.0
    %47 = vmatpush1.msra.mxu0 0.0
    %48 = vmatprep.subr.mxu0 0.0
    %49 = vmatpush1.msra.mxu0 0.0
    %50 = vmatprep.subr.mxu0 0.0
    %51 = vmatpush1.msra.mxu0 0.0
    %52 = vmatprep.subr.mxu0 0.0
    %53 = vmatpush1.msra.mxu0 0.0
    %54 = vmatprep.subr.mxu0 0.0
    %55 = vmatpush1.msra.mxu0 0.0
    %56 = vmatprep.subr.mxu0 0.0
    %57 = vmatpush1.msra.mxu0 0.0
    %58 = vmatprep.subr.mxu0 0.0
    %59 = vmatpush1.msra.mxu0 0.0
    %60 = vmatprep.subr.mxu0 0.0
    %61 = vmatpush1.msra.mxu0 0.0
    %62 = vmatprep.subr.mxu0 0.0
    %63 = vmatpush1.msra.mxu0 0.0
    %64 = vmatprep.subr.mxu0 0.0
    %65 = vmatpush1.msra.mxu0 0.0
    %66 = vmatprep.subr.mxu0 0.0
    %67 = vmatpush1.msra.mxu0 0.0
    %68 = vmatprep.subr.mxu0 0.0
    %69 = vmatpush1.msra.mxu0 0.0
    %70 = vmatprep.subr.mxu0 0.0
    %71 = vmatpush1.msra.mxu0 0.0
    %72 = vmatprep.subr.mxu0 0.0
    %73 = vmatpush1.msra.mxu0 0.0
    %74 = vmatprep.subr.mxu0 0.0
    %75 = vmatpush1.msra.mxu0 0.0
    %76 = vmatprep.subr.mxu0 0.0
    %77 = vmatpush1.msra.mxu0 0.0
    %78 = vmatprep.subr.mxu0 0.0
    %79 = vmatpush1.msra.mxu0 0.0
    %80 = vmatprep.subr.mxu0 0.0
    %81 = vmatpush1.msra.mxu0 0.0
    %82 = vmatprep.subr.mxu0 0.0
    %83 = vmatpush1.msra.mxu0 0.0
    %84 = vmatprep.subr.mxu0 0.0
    %85 = vmatpush1.msra.mxu0 0.0
    %86 = vmatprep.subr.mxu0 0.0
    %87 = vmatpush1.msra.mxu0 0.0
    %88 = vmatprep.subr.mxu0 0.0
    %89 = vmatpush1.msra.mxu0 0.0
    %90 = vmatprep.subr.mxu0 0.0
    %91 = vmatpush1.msra.mxu0 0.0
    %92 = vmatprep.subr.mxu0 0.0
    %93 = vmatpush1.msra.mxu0 0.0
    %94 = vmatprep.mubr.f32.mxu0 0.0
    %95 = vmatmul.mubr.f32.gmra.mrb[0].mxu0 %v25
    %v96 = vpop.f32.mrb[0].mxu0
    %v97 = vadd.f32 0.0, %v96
    %v98 = vpop.f32.mrb[0].mxu0
    %99 = vmatprep.mubr.f32.mxu0 0.0
    %100 = vmatmul.mubr.f32.gmra.mrb[0].mxu0 %v28
    %v101 = vpop.f32.mrb[0].mxu0
    %v102 = vadd.f32 0.0, %v101
    %v103 = vpop.f32.mrb[0].mxu0
    %104 = vdwg.mxu0
    %vm105 = vcmask 97280
    %106 = vst.msk [vmem:[#allocation2] sm:$0xff] %vm105, %v97
    %107 = vst.msk [vmem:[#allocation2 + $0x8] sm:$0xff] %vm105, %v102
    %v108 = vld [vmem:[%s2] sm:$0xff]
    %v109 = vld [vmem:[%s2 + $0x8] sm:$0xff]
    %v110 = vld [vmem:[%s2 + $0x10] sm:$0xff]
    %111 = vmatprep.subr.mxu0 0.0
    %112 = vmatpush1.msra.mxu0 %v108
    %113 = vmatprep.subr.mxu0 0.0
    %114 = vmatpush1.msra.mxu0 %v109
    %115 = vmatprep.subr.mxu0 0.0
    %116 = vmatpush1.msra.mxu0 %v110
    %117 = vmatprep.subr.mxu0 0.0
    %118 = vmatpush1.msra.mxu0 0.0
    %119 = vmatprep.subr.mxu0 0.0
    %120 = vmatpush1.msra.mxu0 0.0
    %121 = vmatprep.subr.mxu0 0.0
    %122 = vmatpush1.msra.mxu0 0.0
    %123 = vmatprep.subr.mxu0 0.0
    %124 = vmatpush1.msra.mxu0 0.0
    %125 = vmatprep.subr.mxu0 0.0
    %126 = vmatpush1.msra.mxu0 0.0
    %127 = vmatprep.subr.mxu0 0.0
    %128 = vmatpush1.msra.mxu0 0.0
    %129 = vmatprep.subr.mxu0 0.0
    %130 = vmatpush1.msra.mxu0 0.0
    %131 = vmatprep.subr.mxu0 0.0
    %132 = vmatpush1.msra.mxu0 0.0
    %133 = vmatprep.subr.mxu0 0.0
    %134 = vmatpush1.msra.mxu0 0.0
    %135 = vmatprep.subr.mxu0 0.0
    %136 = vmatpush1.msra.mxu0 0.0
    %137 = vmatprep.subr.mxu0 0.0
    %138 = vmatpush1.msra.mxu0 0.0
    %139 = vmatprep.subr.mxu0 0.0
    %140 = vmatpush1.msra.mxu0 0.0
    %141 = vmatprep.subr.mxu0 0.0
    %142 = vmatpush1.msra.mxu0 0.0
    %143 = vmatprep.subr.mxu0 0.0
    %144 = vmatpush1.msra.mxu0 0.0
    %145 = vmatprep.subr.mxu0 0.0
    %146 = vmatpush1.msra.mxu0 0.0
    %147 = vmatprep.subr.mxu0 0.0
    %148 = vmatpush1.msra.mxu0 0.0
    %149 = vmatprep.subr.mxu0 0.0
    %150 = vmatpush1.msra.mxu0 0.0
    %151 = vmatprep.subr.mxu0 0.0
    %152 = vmatpush1.msra.mxu0 0.0
    %153 = vmatprep.subr.mxu0 0.0
    %154 = vmatpush1.msra.mxu0 0.0
    %155 = vmatprep.subr.mxu0 0.0
    %156 = vmatpush1.msra.mxu0 0.0
    %157 = vmatprep.subr.mxu0 0.0
    %158 = vmatpush1.msra.mxu0 0.0
    %159 = vmatprep.subr.mxu0 0.0
    %160 = vmatpush1.msra.mxu0 0.0
    %161 = vmatprep.subr.mxu0 0.0
    %162 = vmatpush1.msra.mxu0 0.0
    %163 = vmatprep.subr.mxu0 0.0
    %164 = vmatpush1.msra.mxu0 0.0
    %165 = vmatprep.subr.mxu0 0.0
    %166 = vmatpush1.msra.mxu0 0.0
    %167 = vmatprep.subr.mxu0 0.0
    %168 = vmatpush1.msra.mxu0 0.0
    %169 = vmatprep.subr.mxu0 0.0
    %170 = vmatpush1.msra.mxu0 0.0
    %171 = vmatprep.subr.mxu0 0.0
    %172 = vmatpush1.msra.mxu0 0.0
    %173 = vmatprep.subr.mxu0 0.0
    %174 = vmatpush1.msra.mxu0 0.0
    %175 = vmatprep.mubr.f32.mxu0 0.0
    %176 = vmatmul.mubr.f32.gmra.mrb[0].mxu0 %v25
    %v177 = vpop.f32.mrb[0].mxu0
    %v178 = vadd.f32 0.0, %v177
    %v179 = vpop.f32.mrb[0].mxu0
    %180 = vmatprep.mubr.f32.mxu0 0.0
    %181 = vmatmul.mubr.f32.gmra.mrb[0].mxu0 %v28
    %v182 = vpop.f32.mrb[0].mxu0
    %v183 = vadd.f32 0.0, %v182
    %v184 = vpop.f32.mrb[0].mxu0
    %185 = vdwg.mxu0
    %186 = vst.msk [vmem:[#allocation4] sm:$0xff] %vm105, %v178
    %187 = vst.msk [vmem:[#allocation4 + $0x8] sm:$0xff] %vm105, %v183
    // Predicated region
    $region14: #{tpu_custom_call.1} parent=1 // pred_check
      _
    $region15: #{tpu_custom_call.1} parent=1 // pred_check_branch
      %189 = sbr.rel (0) target = $region17
    $region16: #{tpu_custom_call.1} parent=1 // pred_region
      %s191 = ssub.s32 256, 256
      %192 = vsyncadd [#allocation3], %s191
      %s193 = sshll.u32 [#allocation2], 4
      %s194 = int_to_ptr.vmem [resolvable:$true] %s193
      %199 = dma.vmem_to_hbm [thread:$0]  %s194, 256, %s3, [#allocation3], 128, 128, 8
    $region17: #{tpu_custom_call.1} parent=1 // pred_fallthru
      _
    // Predicated region
    $region18: #{tpu_custom_call.1} parent=1 // pred_check
      _
    $region19: #{tpu_custom_call.1} parent=1 // pred_check_branch
      %201 = sbr.rel (0) target = $region21
    $region20: #{tpu_custom_call.1} parent=1 // pred_region
      %s203 = ssub.s32 256, 256
      %204 = vsyncadd [#allocation5], %s203
      %s205 = sshll.u32 [#allocation4], 4
      %s206 = int_to_ptr.vmem [resolvable:$true] %s205
      %211 = dma.vmem_to_hbm [thread:$0]  %s206, 256, %s4, [#allocation5], 128, 128, 8
    $region21: #{tpu_custom_call.1} parent=1 // pred_fallthru
      _
    // Predicated region
    $region22: #{tpu_custom_call.1} parent=1 // pred_check
      _
    $region23: #{tpu_custom_call.1} parent=1 // pred_check_branch
      %213 = sbr.rel (0) target = $region25
    $region24: #{tpu_custom_call.1} parent=1 // pred_region
      %214 = dma.done [#allocation3], 256
    $region25: #{tpu_custom_call.1} parent=1 // pred_fallthru
      _
    // Predicated region
    $region26: #{tpu_custom_call.1} parent=1 // pred_check
      _
    $region27: #{tpu_custom_call.1} parent=1 // pred_check_branch
      %216 = sbr.rel (0) target = $region29
    $region28: #{tpu_custom_call.1} parent=1 // pred_region
      %217 = dma.done [#allocation5], 256
    $region29: #{tpu_custom_call.1} parent=1 // pred_fallthru
      _
    %218 = vsyncpa [#allocation3], 1
    %219 = vsyncpa [#allocation5], 1

</llo_original>
